<compile_context>
chip_gen: v6e
topology: v6e:2x2x1
jax: 0.10.0
libtpu: 0.0.40
codegen_flags: <defaults>
</compile_context>

<pallas_src>
import jax
import jax.numpy as jnp
from jax.experimental import pallas as pl
from jax.experimental.pallas import tpu as pltpu

N_INGRS = 555
N_HEADS = 5
N_OUT = N_INGRS + N_HEADS     # 560 live output columns (555 ingrs + 5 nutrients)
N_OUT_PAD = 640               # 5 * 128: lane-dense single output store
HEAD_NAMES = ["cal", "mass", "fat", "carb", "protein"]


# --------------------------------------------------------------------------- #
# Kernel
# --------------------------------------------------------------------------- #
def _regressor_kernel(
    x_ref,                     # (TB, in_dim)  f32
    w1_ref, b1_ref,            # fc1:   (in_dim, H) bf16, (1, H)  f32
    wbr_ref, bbr_ref,          # fused branch layer-0: (H, 6H) bf16, (1, 6H) f32
    w2_ref, b2_ref,            # fused block-diag output layer: (6H, 640) bf16, (1, 640) f32
    out_ref,                   # (TB, 640) f32  (cols 0:555 ingrs, 555:560 nutrients)
):
    # fc1: Linear + ReLU (shared trunk), bf16 MXU with f32 accumulation.
    x = x_ref[...].astype(jnp.bfloat16)
    h = jnp.dot(x, w1_ref[...], preferred_element_type=jnp.float32) + b1_ref[...]
    h = jnp.maximum(h, 0.0).astype(jnp.bfloat16)

    # Fused branch first layer: one (H, 6H) dot covers regress_ingrs layer-0
    # and all five head layer-0s, then ReLU.  No per-branch slicing needed.
    br = jnp.dot(h, wbr_ref[...], preferred_element_type=jnp.float32) + bbr_ref[...]
    br = jnp.maximum(br, 0.0).astype(jnp.bfloat16)

    # Fused, block-structured output layer: one (6H, 640) dot produces both the
    # 555-wide ingrs logits and the 5 nutrient scalars in a single lane-dense
    # store.  Padding columns 560..639 are zero and sliced off in the wrapper.
    out_ref[...] = (
        jnp.dot(br, w2_ref[...], preferred_element_type=jnp.float32) + b2_ref[...]
    )


# --------------------------------------------------------------------------- #
# Parameters
# --------------------------------------------------------------------------- #
def init_params(key, in_dim, hidden_dim):
    """Deterministic synthetic parameters with the same shapes as the PyTorch module."""
    ks = jax.random.split(key, 6)
    s = 0.05

    def w(k, shape):
        return jax.random.normal(k, shape, dtype=jnp.float32) * s

    raw = {
        "w1": w(ks[0], (in_dim, hidden_dim)),
        "b1": w(ks[1], (1, hidden_dim)),
        "wi1": w(ks[2], (hidden_dim, hidden_dim)),
        "bi1": w(ks[3], (1, hidden_dim)),
        "wi2": w(ks[4], (hidden_dim, N_INGRS)),
        "bi2": w(ks[5], (1, N_INGRS)),
        "wh1": [], "bh1": [], "wh2": [], "bh2": [],
    }
    for i in range(N_HEADS):
        raw["wh1"].append(w(jax.random.fold_in(key, 10 + i), (hidden_dim, hidden_dim)))
        raw["bh1"].append(w(jax.random.fold_in(key, 20 + i), (1, hidden_dim)))
        raw["wh2"].append(w(jax.random.fold_in(key, 30 + i), (hidden_dim, 1)))
        raw["bh2"].append(w(jax.random.fold_in(key, 40 + i), (1, 1)))
    return raw


def fuse_params(raw):
    """Build the fused / padded / bf16 kernel parameters from raw f32 params."""
    H = raw["w1"].shape[1]

    w1 = raw["w1"].astype(jnp.bfloat16)
    b1 = raw["b1"]                                            # f32 bias

    # Branch-first fusion: [wi1 | wh1_cal | ... | wh1_protein] -> (H, 6H).
    wbr = jnp.concatenate([raw["wi1"]] + raw["wh1"], axis=1).astype(jnp.bfloat16)
    bbr = jnp.concatenate([raw["bi1"]] + raw["bh1"], axis=1)  # (1, 6H) f32

    # Merged, block-structured second layer: (6H, 640).
    #   rows 0:H           , cols 0:555      -> ingrs weight
    #   rows (i+1)H:(i+2)H , col  555+i      -> head i weight
    # All other entries (incl. padding cols 560..639) are exactly zero.
    w2 = jnp.zeros((6 * H, N_OUT_PAD), jnp.float32)
    b2 = jnp.zeros((1, N_OUT_PAD), jnp.float32)
    w2 = w2.at[:H, :N_INGRS].set(raw["wi2"])
    b2 = b2.at[:, :N_INGRS].set(raw["bi2"])
    for i in range(N_HEADS):
        w2 = w2.at[(i + 1) * H:(i + 2) * H, N_INGRS + i:N_INGRS + i + 1].set(raw["wh2"][i])
        b2 = b2.at[:, N_INGRS + i:N_INGRS + i + 1].set(raw["bh2"][i])
    w2 = w2.astype(jnp.bfloat16)

    return (w1, b1, wbr, bbr, w2, b2)


# --------------------------------------------------------------------------- #
# Wrapper
# --------------------------------------------------------------------------- #
def _round_up(n, m):
    return (n + m - 1) // m * m


def _physical_vmem_bytes():
    # Generation-aware VMEM cap (v5e/v6e: 128 MiB, v7x: 64 MiB per TensorCore).
    try:
        return int(pltpu.get_tpu_info().vmem_capacity_bytes)
    except Exception:
        return 64 * 1024 * 1024   # conservative fallback = v7x per-core VMEM


@jax.jit
def regressor_ingrs_forward(x, fused):
    w1, b1, wbr, bbr, w2, b2 = fused
    B, in_dim = x.shape
    H = w1.shape[1]

    # Batch tile selection (kernel is memory/overhead-bound -> big tiles):
    #   * tiny batch: one 8-row-aligned tile,
    #   * large batch: tiles up to 1024 rows, keeping >=2 grid steps so the
    #     "parallel" batch axis can shard across both v7x TensorCores.
    if B < 256:
        TB = _round_up(B, 8)
    else:
        TB = min(1024, _round_up((B + 1) // 2, 128))
    Bp = _round_up(B, TB)
    if Bp != B:
        x = jnp.pad(x, ((0, Bp - B), (0, 0)))
    grid = (Bp // TB,)

    def _resident(arr):
        # Whole-array block, constant index_map -> weight stays in VMEM across steps.
        return pl.BlockSpec(arr.shape, lambda i: (0,) * arr.ndim)

    in_specs = [pl.BlockSpec((TB, in_dim), lambda i: (i, 0))] + [
        _resident(a) for a in fused
    ]
    out_specs = pl.BlockSpec((TB, N_OUT_PAD), lambda i: (i, 0))

    # VMEM budget: resident weights (x2 in case the compiler double-buffers the
    # constant-index blocks) + double-buffered x/out tiles + activation temps,
    # clamped to 90% of the physical per-core VMEM.
    weight_bytes = sum(int(a.size) * a.dtype.itemsize for a in fused)
    io_tile_bytes = 2 * TB * (in_dim + N_OUT_PAD) * 4
    act_bytes = TB * (8 * H + N_OUT_PAD) * 4
    vmem_limit = max(32 * 1024 * 1024, 2 * weight_bytes + io_tile_bytes + 2 * act_bytes)
    vmem_limit = min(vmem_limit, int(0.9 * _physical_vmem_bytes()))

    flops = 2 * Bp * (in_dim * H + H * 6 * H + 6 * H * N_OUT_PAD)
    bytes_accessed = (
        Bp * in_dim * 4 + Bp * N_OUT_PAD * 4 + weight_bytes
    )
    cost = pl.CostEstimate(flops=flops, transcendentals=0, bytes_accessed=bytes_accessed)

    out_p = pl.pallas_call(
        _regressor_kernel,
        grid=grid,
        in_specs=in_specs,
        out_specs=out_specs,
        out_shape=jax.ShapeDtypeStruct((Bp, N_OUT_PAD), jnp.float32),
        compiler_params=pltpu.CompilerParams(
            dimension_semantics=("parallel",),
            vmem_limit_bytes=vmem_limit,
        ),
        cost_estimate=cost,
    )(x, *fused)

    out_p = out_p[:B]
    out = {
        name: out_p[:, N_INGRS + k:N_INGRS + k + 1] for k, name in enumerate(HEAD_NAMES)
    }
    out["ingrs"] = out_p[:, :N_INGRS]
    return out


# --------------------------------------------------------------------------- #
# References
# --------------------------------------------------------------------------- #
def reference_forward_f32(x, raw):
    """Pure-JAX f32 reference mirroring the PyTorch forward exactly."""
    h = jax.nn.relu(x @ raw["w1"] + raw["b1"])
    hi = jax.nn.relu(h @ raw["wi1"] + raw["bi1"])
    out = {"ingrs": hi @ raw["wi2"] + raw["bi2"]}
    for i, name in enumerate(HEAD_NAMES):
        hk = jax.nn.relu(h @ raw["wh1"][i] + raw["bh1"][i])
        out[name] = hk @ raw["wh2"][i] + raw["bh2"][i]
    return out


def reference_forward_bf16(x, raw):
    """Reference mirroring the kernel's bf16-MXU / f32-accumulate numerics."""
    def dot(a, w):
        return jnp.dot(a.astype(jnp.bfloat16), w.astype(jnp.bfloat16),
                       preferred_element_type=jnp.float32)

    h = jax.nn.relu(dot(x, raw["w1"]) + raw["b1"])
    hi = jax.nn.relu(dot(h, raw["wi1"]) + raw["bi1"])
    out = {"ingrs": dot(hi, raw["wi2"]) + raw["bi2"]}
    for i, name in enumerate(HEAD_NAMES):
        hk = jax.nn.relu(dot(h, raw["wh1"][i]) + raw["bh1"][i])
        out[name] = dot(hk, raw["wh2"][i]) + raw["bh2"][i]
    return out


# --------------------------------------------------------------------------- #
# Self-test
# --------------------------------------------------------------------------- #
if __name__ == "__main__":
    key = jax.random.PRNGKey(0)
    B, in_dim, hidden_dim = 8, 32, 32

    k_x, k_p = jax.random.split(key)
    x = jax.random.normal(k_x, (B, in_dim), dtype=jnp.float32)
    raw = init_params(k_p, in_dim, hidden_dim)
    fused = fuse_params(raw)

    out = regressor_ingrs_forward(x, fused)
    jax.block_until_ready(out)

    ref_bf16 = reference_forward_bf16(x, raw)
    ref_f32 = reference_forward_f32(x, raw)
    for k in HEAD_NAMES + ["ingrs"]:
        assert out[k].shape == ref_f32[k].shape, (k, out[k].shape, ref_f32[k].shape)
        # Tight check vs a reference using the same bf16/f32 numerics.
        assert jnp.allclose(out[k], ref_bf16[k], atol=1e-3, rtol=1e-2), k
        # Loose check vs the exact f32 PyTorch-equivalent forward.
        assert jnp.allclose(out[k], ref_f32[k], atol=3e-2, rtol=3e-2), k

    print("KERNEL_OK")
</pallas_src>

<mosaic_0001>
module attributes {stable_mosaic.version = 11 : i64} {
  func.func @_regressor_kernel(%arg0: i32, %arg1: memref<8x32xf32, #tpu.memory_space<vmem>>, %arg2: memref<32x32xbf16, #tpu.memory_space<vmem>>, %arg3: memref<1x32xf32, #tpu.memory_space<vmem>>, %arg4: memref<32x192xbf16, #tpu.memory_space<vmem>>, %arg5: memref<1x192xf32, #tpu.memory_space<vmem>>, %arg6: memref<192x640xbf16, #tpu.memory_space<vmem>>, %arg7: memref<1x640xf32, #tpu.memory_space<vmem>>, %arg8: memref<8x640xf32, #tpu.memory_space<vmem>>) attributes {dimension_semantics = [#tpu.dimension_semantics<parallel>], iteration_bounds = array<i64: 1>, scalar_prefetch = 0 : i64, scratch_operands = 0 : i64, tpu.core_type = #tpu.core_type<tc>, window_params = [{transform_indices = @transform_0, window_bounds = array<i64: 8, 32>}, {pipeline_mode = #tpu.pipeline_mode<synchronous>, transform_indices = @transform_1, window_bounds = array<i64: 32, 32>}, {pipeline_mode = #tpu.pipeline_mode<synchronous>, transform_indices = @transform_2, window_bounds = array<i64: 1, 32>}, {pipeline_mode = #tpu.pipeline_mode<synchronous>, transform_indices = @transform_3, window_bounds = array<i64: 32, 192>}, {pipeline_mode = #tpu.pipeline_mode<synchronous>, transform_indices = @transform_4, window_bounds = array<i64: 1, 192>}, {pipeline_mode = #tpu.pipeline_mode<synchronous>, transform_indices = @transform_5, window_bounds = array<i64: 192, 640>}, {pipeline_mode = #tpu.pipeline_mode<synchronous>, transform_indices = @transform_6, window_bounds = array<i64: 1, 640>}, {transform_indices = @transform_7, window_bounds = array<i64: 8, 640>}]} {
    %c0 = arith.constant 0 : index
    %c0_0 = arith.constant 0 : index
    %0 = vector.load %arg1[%c0, %c0_0] : memref<8x32xf32, #tpu.memory_space<vmem>>, vector<8x32xf32>
    %1 = arith.truncf %0 : vector<8x32xf32> to vector<8x32xbf16>
    %c0_1 = arith.constant 0 : index
    %c0_2 = arith.constant 0 : index
    %2 = vector.load %arg2[%c0_1, %c0_2] : memref<32x32xbf16, #tpu.memory_space<vmem>>, vector<32x32xbf16>
    %cst = arith.constant dense<0.000000e+00> : vector<8x32xf32>
    %3 = tpu.matmul %1, %2, %cst {dimension_numbers = #tpu.dot_dimension_numbers<[1], [0], [0], [1], [0, 0, 1, 1], [], []>} : vector<8x32xbf16>, vector<32x32xbf16>, vector<8x32xf32> -> vector<8x32xf32>
    %c0_3 = arith.constant 0 : index
    %c0_4 = arith.constant 0 : index
    %4 = vector.load %arg3[%c0_3, %c0_4] : memref<1x32xf32, #tpu.memory_space<vmem>>, vector<1x32xf32>
    %5 = vector.broadcast %4 : vector<1x32xf32> to vector<8x32xf32>
    %6 = arith.addf %3, %5 : vector<8x32xf32>
    %cst_5 = arith.constant 0.000000e+00 : f32
    %7 = vector.broadcast %cst_5 : f32 to vector<8x32xf32>
    %8 = arith.maximumf %6, %7 : vector<8x32xf32>
    %9 = arith.truncf %8 : vector<8x32xf32> to vector<8x32xbf16>
    %c0_6 = arith.constant 0 : index
    %c0_7 = arith.constant 0 : index
    %10 = vector.load %arg4[%c0_6, %c0_7] : memref<32x192xbf16, #tpu.memory_space<vmem>>, vector<32x192xbf16>
    %cst_8 = arith.constant dense<0.000000e+00> : vector<8x192xf32>
    %11 = tpu.matmul %9, %10, %cst_8 {dimension_numbers = #tpu.dot_dimension_numbers<[1], [0], [0], [1], [0, 0, 1, 1], [], []>} : vector<8x32xbf16>, vector<32x192xbf16>, vector<8x192xf32> -> vector<8x192xf32>
    %c0_9 = arith.constant 0 : index
    %c0_10 = arith.constant 0 : index
    %12 = vector.load %arg5[%c0_9, %c0_10] : memref<1x192xf32, #tpu.memory_space<vmem>>, vector<1x192xf32>
    %13 = vector.broadcast %12 : vector<1x192xf32> to vector<8x192xf32>
    %14 = arith.addf %11, %13 : vector<8x192xf32>
    %cst_11 = arith.constant 0.000000e+00 : f32
    %15 = vector.broadcast %cst_11 : f32 to vector<8x192xf32>
    %16 = arith.maximumf %14, %15 : vector<8x192xf32>
    %17 = arith.truncf %16 : vector<8x192xf32> to vector<8x192xbf16>
    %c0_12 = arith.constant 0 : index
    %c0_13 = arith.constant 0 : index
    %18 = vector.load %arg6[%c0_12, %c0_13] : memref<192x640xbf16, #tpu.memory_space<vmem>>, vector<192x640xbf16>
    %cst_14 = arith.constant dense<0.000000e+00> : vector<8x640xf32>
    %19 = tpu.matmul %17, %18, %cst_14 {dimension_numbers = #tpu.dot_dimension_numbers<[1], [0], [0], [1], [0, 0, 1, 1], [], []>} : vector<8x192xbf16>, vector<192x640xbf16>, vector<8x640xf32> -> vector<8x640xf32>
    %c0_15 = arith.constant 0 : index
    %c0_16 = arith.constant 0 : index
    %20 = vector.load %arg7[%c0_15, %c0_16] : memref<1x640xf32, #tpu.memory_space<vmem>>, vector<1x640xf32>
    %21 = vector.broadcast %20 : vector<1x640xf32> to vector<8x640xf32>
    %22 = arith.addf %19, %21 : vector<8x640xf32>
    %c0_17 = arith.constant 0 : index
    %c0_18 = arith.constant 0 : index
    %23 = vector.load %arg8[%c0_17, %c0_18] : memref<8x640xf32, #tpu.memory_space<vmem>>, vector<8x640xf32>
    tpu.vector_store %arg8[%c0_17, %c0_18], %22 {strides = array<i32>} : memref<8x640xf32, #tpu.memory_space<vmem>>, vector<8x640xf32>,
    return
  }
  func.func @transform_0(%arg0: i32) -> (i32, i32) {
    %c0_i32 = arith.constant 0 : i32
    %c0_i32_0 = arith.constant 0 : i32
    return %arg0, %c0_i32 : i32, i32
  }
  func.func @transform_1(%arg0: i32) -> (i32, i32) {
    %c0_i32 = arith.constant 0 : i32
    %c0_i32_0 = arith.constant 0 : i32
    %c0_i32_1 = arith.constant 0 : i32
    return %c0_i32, %c0_i32_0 : i32, i32
  }
  func.func @transform_2(%arg0: i32) -> (i32, i32) {
    %c0_i32 = arith.constant 0 : i32
    %c0_i32_0 = arith.constant 0 : i32
    %c0_i32_1 = arith.constant 0 : i32
    return %c0_i32, %c0_i32_0 : i32, i32
  }
  func.func @transform_3(%arg0: i32) -> (i32, i32) {
    %c0_i32 = arith.constant 0 : i32
    %c0_i32_0 = arith.constant 0 : i32
    %c0_i32_1 = arith.constant 0 : i32
    return %c0_i32, %c0_i32_0 : i32, i32
  }
  func.func @transform_4(%arg0: i32) -> (i32, i32) {
    %c0_i32 = arith.constant 0 : i32
    %c0_i32_0 = arith.constant 0 : i32
    %c0_i32_1 = arith.constant 0 : i32
    return %c0_i32, %c0_i32_0 : i32, i32
  }
  func.func @transform_5(%arg0: i32) -> (i32, i32) {
    %c0_i32 = arith.constant 0 : i32
    %c0_i32_0 = arith.constant 0 : i32
    %c0_i32_1 = arith.constant 0 : i32
    return %c0_i32, %c0_i32_0 : i32, i32
  }
  func.func @transform_6(%arg0: i32) -> (i32, i32) {
    %c0_i32 = arith.constant 0 : i32
    %c0_i32_0 = arith.constant 0 : i32
    %c0_i32_1 = arith.constant 0 : i32
    return %c0_i32, %c0_i32_0 : i32, i32
  }
  func.func @transform_7(%arg0: i32) -> (i32, i32) {
    %c0_i32 = arith.constant 0 : i32
    %c0_i32_0 = arith.constant 0 : i32
    return %arg0, %c0_i32 : i32, i32
  }
}

</mosaic_0001>

<llo_original>
// kernel: regressor_ingrs_forward.1
$region0: #{regressor_ingrs_forward.1}
  #allocation0 [shape = 'u32[]', space=smem, size = 0x4, offset = 0x4, fixed_abs, tag = 'smem constant byte address 0x4 - core index']
  #allocation1 [shape = 'u32[144,128]{1,0:T(1,128)}', space=vmem, size = 0x12000, scoped, tag = 'internal scratch']
  %s0 = inlined_call_operand.hbm [shape: f32[8,32], index: 0, kind: input, shape index: {}]
  %s1 = inlined_call_operand.hbm [shape: bf16[32,32], index: 1, kind: input, shape index: {}]
  %s2 = inlined_call_operand.vmem [shape: f32[1,32], index: 2, kind: input, shape index: {}]
  %s3 = inlined_call_operand.hbm [shape: bf16[32,192], index: 3, kind: input, shape index: {}]
  %s4 = inlined_call_operand.vmem [shape: f32[1,192], index: 4, kind: input, shape index: {}]
  %s5 = inlined_call_operand.hbm [shape: bf16[192,640], index: 5, kind: input, shape index: {}]
  %s6 = inlined_call_operand.vmem [shape: f32[1,640], index: 6, kind: input, shape index: {}]
  %s7 = inlined_call_operand.vmem [shape: f32[8,640], index: 7, kind: output, shape index: {}]
  %s8 = sld [smem:[#allocation0]]
  $region54: #{regressor_ingrs_forward.1} parent=0
    _
  %s10 = ssub.s32 1, %s8
  %s11 = scalar_select 0, %s10, %s8
  $region1: #{regressor_ingrs_forward.1} parent=0
    #allocation2 [shape = 'u8[4096]{0}', space=vmem, size = 0x1000, scoped, tag = 'input window, operand 0, single buffered']
    #allocation3 [shape = 's32[1]{0}', space=sflag, size = 0x4, scoped, tag = 'scoped memory for regressor_ingrs_forward.1']
    #allocation4 [shape = 'u8[8192]{0}', space=vmem, size = 0x2000, scoped, tag = 'input window, operand 1, single buffered']
    #allocation5 [shape = 's32[1]{0}', space=sflag, size = 0x4, scoped, tag = 'scoped memory for regressor_ingrs_forward.1']
    #allocation6 [shape = 'u8[16384]{0}', space=vmem, size = 0x4000, scoped, tag = 'input window, operand 3, single buffered']
    #allocation7 [shape = 'u8[245760]{0}', space=vmem, size = 0x3c000, scoped, tag = 'input window, operand 5, single buffered']
    #allocation8 [shape = 's32[1]{0}', space=sflag, size = 0x4, scoped, tag = 'scoped memory for regressor_ingrs_forward.1']
    %12 = vsyncpa [#allocation3], 0
    %13 = vsyncpa [#allocation5], 0
    %14 = vsyncpa [#allocation8], 0
    // Predicated region
    $region2: #{regressor_ingrs_forward.1} parent=1 // pred_check
      _
    $region3: #{regressor_ingrs_forward.1} parent=1 // pred_check_branch
      %16 = sbr.rel (0) target = $region5
    $region4: #{regressor_ingrs_forward.1} parent=1 // pred_region
      %s18 = ssub.s32 128, 128
      %19 = vsyncadd [#allocation3], %s18
      %s21 = sshll.u32 [#allocation2], 4
      %s22 = int_to_ptr.vmem [resolvable:$true] %s21
      %24 = dma.hbm_to_vmem [thread:$0]  %s0, 128, %s22, [#allocation3]
    $region5: #{regressor_ingrs_forward.1} parent=1 // pred_fallthru
      _
    // Predicated region
    $region6: #{regressor_ingrs_forward.1} parent=1 // pred_check
      _
    $region7: #{regressor_ingrs_forward.1} parent=1 // pred_check_branch
      %26 = sbr.rel (0) target = $region9
    $region8: #{regressor_ingrs_forward.1} parent=1 // pred_region
      %s28 = ssub.s32 256, 256
      %29 = vsyncadd [#allocation5], %s28
      %s30 = sshll.u32 [#allocation4], 4
      %s31 = int_to_ptr.vmem [resolvable:$true] %s30
      %36 = dma.hbm_to_vmem [thread:$0]  %s1, 256, %s31, [#allocation5], 64, 64, 4
    $region9: #{regressor_ingrs_forward.1} parent=1 // pred_fallthru
      _
    // Predicated region
    $region10: #{regressor_ingrs_forward.1} parent=1 // pred_check
      _
    $region11: #{regressor_ingrs_forward.1} parent=1 // pred_check_branch
      %38 = sbr.rel (0) target = $region13
    $region12: #{regressor_ingrs_forward.1} parent=1 // pred_region
      _
    $region13: #{regressor_ingrs_forward.1} parent=1 // pred_fallthru
      _
    // Predicated region
    $region14: #{regressor_ingrs_forward.1} parent=1 // pred_check
      _
    $region15: #{regressor_ingrs_forward.1} parent=1 // pred_check_branch
      %40 = sbr.rel (0) target = $region17
    $region16: #{regressor_ingrs_forward.1} parent=1 // pred_region
      %s42 = ssub.s32 512, 512
      %43 = vsyncadd [#allocation5], %s42
      %s44 = sshll.u32 [#allocation6], 4
      %s45 = int_to_ptr.vmem [resolvable:$true] %s44
      %50 = dma.hbm_to_vmem [thread:$0]  %s3, 512, %s45, [#allocation5], 128, 128, 8
    $region17: #{regressor_ingrs_forward.1} parent=1 // pred_fallthru
      _
    // Predicated region
    $region18: #{regressor_ingrs_forward.1} parent=1 // pred_check
      _
    $region19: #{regressor_ingrs_forward.1} parent=1 // pred_check_branch
      %52 = sbr.rel (0) target = $region21
    $region20: #{regressor_ingrs_forward.1} parent=1 // pred_region
      _
    $region21: #{regressor_ingrs_forward.1} parent=1 // pred_fallthru
      _
    // Predicated region
    $region22: #{regressor_ingrs_forward.1} parent=1 // pred_check
      _
    $region23: #{regressor_ingrs_forward.1} parent=1 // pred_check_branch
      %54 = sbr.rel (0) target = $region25
    $region24: #{regressor_ingrs_forward.1} parent=1 // pred_region
      %s56 = ssub.s32 7680, 7680
      %57 = vsyncadd [#allocation8], %s56
      %s58 = sshll.u32 [#allocation7], 4
      %s59 = int_to_ptr.vmem [resolvable:$true] %s58
      %64 = dma.hbm_to_vmem [thread:$0]  %s5, 7680, %s59, [#allocation8], 320, 320, 20
    $region25: #{regressor_ingrs_forward.1} parent=1 // pred_fallthru
      _
    // Predicated region
    $region26: #{regressor_ingrs_forward.1} parent=1 // pred_check
      _
    $region27: #{regressor_ingrs_forward.1} parent=1 // pred_check_branch
      %66 = sbr.rel (0) target = $region29
    $region28: #{regressor_ingrs_forward.1} parent=1 // pred_region
      _
    $region29: #{regressor_ingrs_forward.1} parent=1 // pred_fallthru
      _
    // Predicated region
    $region30: #{regressor_ingrs_forward.1} parent=1 // pred_check
      _
    $region31: #{regressor_ingrs_forward.1} parent=1 // pred_check_branch
      %68 = sbr.rel (0) target = $region33
    $region32: #{regressor_ingrs_forward.1} parent=1 // pred_region
      %69 = dma.done [#allocation3], 128
    $region33: #{regressor_ingrs_forward.1} parent=1 // pred_fallthru
      _
    // Predicated region
    $region34: #{regressor_ingrs_forward.1} parent=1 // pred_check
      _
    $region35: #{regressor_ingrs_forward.1} parent=1 // pred_check_branch
      %71 = sbr.rel (0) target = $region37
    $region36: #{regressor_ingrs_forward.1} parent=1 // pred_region
      %72 = dma.done [#allocation5], 256
    $region37: #{regressor_ingrs_forward.1} parent=1 // pred_fallthru
      _
    // Predicated region
    $region38: #{regressor_ingrs_forward.1} parent=1 // pred_check
      _
    $region39: #{regressor_ingrs_forward.1} parent=1 // pred_check_branch
      %74 = sbr.rel (0) target = $region41
    $region40: #{regressor_ingrs_forward.1} parent=1 // pred_region
      %75 = dma.done [#allocation5], 512
    $region41: #{regressor_ingrs_forward.1} parent=1 // pred_fallthru
      _
    // Predicated region
    $region42: #{regressor_ingrs_forward.1} parent=1 // pred_check
      _
    $region43: #{regressor_ingrs_forward.1} parent=1 // pred_check_branch
      %77 = sbr.rel (0) target = $region45
    $region44: #{regressor_ingrs_forward.1} parent=1 // pred_region
      %78 = dma.done [#allocation8], 7680
    $region45: #{regressor_ingrs_forward.1} parent=1 // pred_fallthru
      _
    %v80 = vld [vmem:[#allocation2] sm:$0xff]
    %v81 = vpack.c.bf16 %v80, %v80
    %v82 = vld [vmem:[#allocation4] sm:$0xf]
    %v83 = vld [vmem:[#allocation4 + $0x4] sm:$0xf]
    %v84 = vld [vmem:[#allocation4 + $0x8] sm:$0xf]
    %v85 = vld [vmem:[#allocation4 + $0xc] sm:$0xf]
    %v86 = vld [vmem:[%s2] sm:$0x1]
    %v88 = vlaneseq
    %v89 = vshrl.u32 %v88, 7
    %v90 = vsub.s32 0, %v89
    %v91 = vrot.slane %v86, %v90
    %v97 = vunpack.c.l.b16 %v82
    %v98 = vunpack.c.l.b16 %v83
    %v99 = vunpack.c.l.b16 %v84
    %v100 = vunpack.c.l.b16 %v85
    %v101 = vpack.c.b16 %v98, %v97
    %v102 = vpack.c.b16 %v100, %v99
    %vm105 = vcmask 261120
    %v107 = vsel %vm105, %v81, 0
    %109 = vmatprep.subr.bf16.mxu0 0
    %110 = vmatpush1.bf16.msra.mxu0 0
    %111 = vmatprep.subr.bf16.mxu0 0
    %112 = vmatpush1.bf16.msra.mxu0 0
    %113 = vmatprep.subr.bf16.mxu0 0
    %114 = vmatpush1.bf16.msra.mxu0 0
    %115 = vmatprep.subr.bf16.mxu0 0
    %116 = vmatpush1.bf16.msra.mxu0 0
    %117 = vmatprep.subr.bf16.mxu0 0
    %118 = vmatpush1.bf16.msra.mxu0 0
    %119 = vmatprep.subr.bf16.mxu0 0
    %120 = vmatpush1.bf16.msra.mxu0 0
    %121 = vmatprep.subr.bf16.mxu0 0
    %122 = vmatpush1.bf16.msra.mxu0 %v102
    %123 = vmatprep.subr.bf16.mxu0 0
    %124 = vmatpush1.bf16.msra.mxu0 %v101
    %125 = vmatprep.subr.bf16.mxu0 0
    %126 = vmatpush2.bf16.msra.mxu0 0
    %127 = vmatprep.subr.bf16.mxu0 0
    %128 = vmatpush2.bf16.msra.mxu0 0
    %129 = vmatprep.subr.bf16.mxu0 0
    %130 = vmatpush2.bf16.msra.mxu0 0
    %131 = vmatprep.subr.bf16.mxu0 0
    %132 = vmatpush2.bf16.msra.mxu0 0
    %133 = vmatprep.subr.bf16.mxu0 0
    %134 = vmatpush2.bf16.msra.mxu0 0
    %135 = vmatprep.subr.bf16.mxu0 0
    %136 = vmatpush2.bf16.msra.mxu0 0
    %137 = vmatprep.subr.bf16.mxu0 0
    %138 = vmatpush2.bf16.msra.mxu0 0
    %139 = vmatprep.subr.bf16.mxu0 0
    %140 = vmatpush2.bf16.msra.mxu0 0
    %141 = vmatprep.mubr.bf16.mxu0 0
    %142 = vmatmul.mubr.bf16.gmra.mxu0 %v107
    %v143 = vpop.f32.mrf.mxu0
    %v144 = vadd.f32 %v91, %v143
    %v145 = vpop.f32.mrf.mxu0
    %v146 = vpop.f32.mrf.mxu0
    %v147 = vpop.f32.mrf.mxu0
    %148 = vdwg.mxu0
    %v149 = vmax.f32 %v144, 0.0
    %v150 = vpack.c.bf16 %v149, %v149
    %v151 = vld [vmem:[#allocation6] sm:$0xff]
    %v152 = vld [vmem:[#allocation6 + $0x8] sm:$0xff]
    %v153 = vld [vmem:[#allocation6 + $0x10] sm:$0xff]
    %v154 = vld [vmem:[#allocation6 + $0x18] sm:$0xff]
    %v155 = vld [vmem:[%s4] sm:$0x3]
    %v157 = vlaneseq
    %v158 = vshrl.u32 %v157, 7
    %v159 = vsub.s32 0, %v158
    %v160 = vrot.slane %v155, %v159
    %v161 = vlaneseq
    %v162 = vshrl.u32 %v161, 7
    %v163 = vsub.s32 1, %v162
    %v164 = vrot.slane %v155, %v163
    %v171 = vunpack.c.l.b16 %v151
    %v172 = vunpack.c.h.b16 %v151
    %v173 = vunpack.c.l.b16 %v152
    %v174 = vunpack.c.h.b16 %v152
    %v175 = vunpack.c.l.b16 %v153
    %v176 = vunpack.c.h.b16 %v153
    %v177 = vunpack.c.l.b16 %v154
    %v178 = vunpack.c.h.b16 %v154
    %v179 = vpack.c.b16 %v173, %v171
    %v180 = vpack.c.b16 %v174, %v172
    %v181 = vpack.c.b16 %v177, %v175
    %v182 = vpack.c.b16 %v178, %v176
    %v188 = vsel %vm105, %v150, 0
    %190 = vmatprep.subr.bf16.mxu0 0
    %191 = vmatpush1.bf16.msra.mxu0 0
    %192 = vmatprep.subr.bf16.mxu0 0
    %193 = vmatpush1.bf16.msra.mxu0 0
    %194 = vmatprep.subr.bf16.mxu0 0
    %195 = vmatpush1.bf16.msra.mxu0 0
    %196 = vmatprep.subr.bf16.mxu0 0
    %197 = vmatpush1.bf16.msra.mxu0 0
    %198 = vmatprep.subr.bf16.mxu0 0
    %199 = vmatpush1.bf16.msra.mxu0 0
    %200 = vmatprep.subr.bf16.mxu0 0
    %201 = vmatpush1.bf16.msra.mxu0 0
    %202 = vmatprep.subr.bf16.mxu0 %v182
    %203 = vmatpush1.bf16.msra.mxu0 %v181
    %204 = vmatprep.subr.bf16.mxu0 %v180
    %205 = vmatpush1.bf16.msra.mxu0 %v179
    %206 = vmatprep.subr.bf16.mxu0 0
    %207 = vmatpush2.bf16.msra.mxu0 0
    %208 = vmatprep.subr.bf16.mxu0 0
    %209 = vmatpush2.bf16.msra.mxu0 0
    %210 = vmatprep.subr.bf16.mxu0 0
    %211 = vmatpush2.bf16.msra.mxu0 0
    %212 = vmatprep.subr.bf16.mxu0 0
    %213 = vmatpush2.bf16.msra.mxu0 0
    %214 = vmatprep.subr.bf16.mxu0 0
    %215 = vmatpush2.bf16.msra.mxu0 0
    %216 = vmatprep.subr.bf16.mxu0 0
    %217 = vmatpush2.bf16.msra.mxu0 0
    %218 = vmatprep.subr.bf16.mxu0 0
    %219 = vmatpush2.bf16.msra.mxu0 0
    %220 = vmatprep.subr.bf16.mxu0 0
    %221 = vmatpush2.bf16.msra.mxu0 0
    %222 = vmatprep.mubr.bf16.mxu0 0
    %223 = vmatmul.mubr.bf16.gmra.mxu0 %v188
    %v224 = vpop.f32.mrf.mxu0
    %v225 = vadd.f32 %v160, %v224
    %v226 = vpop.f32.mrf.mxu0
    %v227 = vadd.f32 %v164, %v226
    %v228 = vpop.f32.mrf.mxu0
    %v229 = vpop.f32.mrf.mxu0
    %230 = vdwg.mxu0
    %v231 = vmax.f32 %v225, 0.0
    %v232 = vmax.f32 %v227, 0.0
    %v233 = vpack.c.bf16 %v231, %v231
    %v234 = vpack.c.bf16 %v232, %v232
    %v235 = vld [vmem:[#allocation7] sm:$0xff]
    %v236 = vld [vmem:[#allocation7 + $0x8] sm:$0xff]
    %v237 = vld [vmem:[#allocation7 + $0x10] sm:$0xf]
    %v238 = vld [vmem:[#allocation7 + $0x14] sm:$0xff]
    %v239 = vld [vmem:[#allocation7 + $0x1c] sm:$0xff]
    %v240 = vld [vmem:[#allocation7 + $0x24] sm:$0xf]
    %v241 = vld [vmem:[#allocation7 + $0x28] sm:$0xff]
    %v242 = vld [vmem:[#allocation7 + $0x30] sm:$0xff]
    %v243 = vld [vmem:[#allocation7 + $0x38] sm:$0xf]
    %v244 = vld [vmem:[#allocation7 + $0x3c] sm:$0xff]
    %v245 = vld [vmem:[#allocation7 + $0x44] sm:$0xff]
    %v246 = vld [vmem:[#allocation7 + $0x4c] sm:$0xf]
    %v247 = vld [vmem:[#allocation7 + $0x50] sm:$0xff]
    %v248 = vld [vmem:[#allocation7 + $0x58] sm:$0xff]
    %v249 = vld [vmem:[#allocation7 + $0x60] sm:$0xf]
    %v250 = vld [vmem:[#allocation7 + $0x64] sm:$0xff]
    %v251 = vld [vmem:[#allocation7 + $0x6c] sm:$0xff]
    %v252 = vld [vmem:[#allocation7 + $0x74] sm:$0xf]
    %v253 = vld [vmem:[#allocation7 + $0x78] sm:$0xff]
    %v254 = vld [vmem:[#allocation7 + $0x80] sm:$0xff]
    %v255 = vld [vmem:[#allocation7 + $0x88] sm:$0xf]
    %v256 = vld [vmem:[#allocation7 + $0x8c] sm:$0xff]
    %v257 = vld [vmem:[#allocation7 + $0x94] sm:$0xff]
    %v258 = vld [vmem:[#allocation7 + $0x9c] sm:$0xf]
    %v259 = vld [vmem:[#allocation7 + $0xa0] sm:$0xff]
    %v260 = vld [vmem:[#allocation7 + $0xa8] sm:$0xff]
    %v261 = vld [vmem:[#allocation7 + $0xb0] sm:$0xf]
    %v262 = vld [vmem:[#allocation7 + $0xb4] sm:$0xff]
    %v263 = vld [vmem:[#allocation7 + $0xbc] sm:$0xff]
    %v264 = vld [vmem:[#allocation7 + $0xc4] sm:$0xf]
    %v265 = vld [vmem:[#allocation7 + $0xc8] sm:$0xff]
    %v266 = vld [vmem:[#allocation7 + $0xd0] sm:$0xff]
    %v267 = vld [vmem:[#allocation7 + $0xd8] sm:$0xf]
    %v268 = vld [vmem:[#allocation7 + $0xdc] sm:$0xff]
    %v269 = vld [vmem:[#allocation7 + $0xe4] sm:$0xff]
    %v270 = vld [vmem:[#allocation7 + $0xec] sm:$0xf]
    %v271 = vld [vmem:[#allocation7 + $0xf0] sm:$0xff]
    %v272 = vld [vmem:[#allocation7 + $0xf8] sm:$0xff]
    %v273 = vld [vmem:[#allocation7 + $0x100] sm:$0xf]
    %v274 = vld [vmem:[#allocation7 + $0x104] sm:$0xff]
    %v275 = vld [vmem:[#allocation7 + $0x10c] sm:$0xff]
    %v276 = vld [vmem:[#allocation7 + $0x114] sm:$0xf]
    %v277 = vld [vmem:[#allocation7 + $0x118] sm:$0xff]
    %v278 = vld [vmem:[#allocation7 + $0x120] sm:$0xff]
    %v279 = vld [vmem:[#allocation7 + $0x128] sm:$0xf]
    %v280 = vld [vmem:[#allocation7 + $0x12c] sm:$0xff]
    %v281 = vld [vmem:[#allocation7 + $0x134] sm:$0xff]
    %v282 = vld [vmem:[#allocation7 + $0x13c] sm:$0xf]
    %v283 = vld [vmem:[#allocation7 + $0x140] sm:$0xff]
    %v284 = vld [vmem:[#allocation7 + $0x148] sm:$0xff]
    %v285 = vld [vmem:[#allocation7 + $0x150] sm:$0xf]
    %v286 = vld [vmem:[#allocation7 + $0x154] sm:$0xff]
    %v287 = vld [vmem:[#allocation7 + $0x15c] sm:$0xff]
    %v288 = vld [vmem:[#allocation7 + $0x164] sm:$0xf]
    %v289 = vld [vmem:[#allocation7 + $0x168] sm:$0xff]
    %v290 = vld [vmem:[#allocation7 + $0x170] sm:$0xff]
    %v291 = vld [vmem:[#allocation7 + $0x178] sm:$0xf]
    %v292 = vld [vmem:[#allocation7 + $0x17c] sm:$0xff]
    %v293 = vld [vmem:[#allocation7 + $0x184] sm:$0xff]
    %v294 = vld [vmem:[#allocation7 + $0x18c] sm:$0xf]
    %v295 = vld [vmem:[#allocation7 + $0x190] sm:$0xff]
    %v296 = vld [vmem:[#allocation7 + $0x198] sm:$0xff]
    %v297 = vld [vmem:[#allocation7 + $0x1a0] sm:$0xf]
    %v298 = vld [vmem:[#allocation7 + $0x1a4] sm:$0xff]
    %v299 = vld [vmem:[#allocation7 + $0x1ac] sm:$0xff]
    %v300 = vld [vmem:[#allocation7 + $0x1b4] sm:$0xf]
    %v301 = vld [vmem:[#allocation7 + $0x1b8] sm:$0xff]
    %v302 = vld [vmem:[#allocation7 + $0x1c0] sm:$0xff]
    %v303 = vld [vmem:[#allocation7 + $0x1c8] sm:$0xf]
    %v304 = vld [vmem:[#allocation7 + $0x1cc] sm:$0xff]
    %v305 = vld [vmem:[#allocation7 + $0x1d4] sm:$0xff]
    %v306 = vld [vmem:[#allocation7 + $0x1dc] sm:$0xf]
    %v307 = vld [vmem:[%s6] sm:$0x1f]
    %v309 = vlaneseq
    %v310 = vshrl.u32 %v309, 7
    %v311 = vsub.s32 0, %v310
    %v312 = vrot.slane %v307, %v311
    %v313 = vlaneseq
    %v314 = vshrl.u32 %v313, 7
    %v315 = vsub.s32 1, %v314
    %v316 = vrot.slane %v307, %v315
    %v317 = vlaneseq
    %v318 = vshrl.u32 %v317, 7
    %v319 = vsub.s32 2, %v318
    %v320 = vrot.slane %v307, %v319
    %v321 = vlaneseq
    %v322 = vshrl.u32 %v321, 7
    %v323 = vsub.s32 3, %v322
    %v324 = vrot.slane %v307, %v323
    %v325 = vlaneseq
    %v326 = vshrl.u32 %v325, 7
    %v327 = vsub.s32 4, %v326
    %v328 = vrot.slane %v307, %v327
    %v406 = vunpack.c.l.b16 %v235
    %v407 = vunpack.c.h.b16 %v235
    %v408 = vunpack.c.l.b16 %v236
    %v409 = vunpack.c.h.b16 %v236
    %v410 = vunpack.c.l.b16 %v237
    %v411 = vunpack.c.l.b16 %v238
    %v412 = vunpack.c.h.b16 %v238
    %v413 = vunpack.c.l.b16 %v239
    %v414 = vunpack.c.h.b16 %v239
    %v415 = vunpack.c.l.b16 %v240
    %v416 = vunpack.c.l.b16 %v241
    %v417 = vunpack.c.h.b16 %v241
    %v418 = vunpack.c.l.b16 %v242
    %v419 = vunpack.c.h.b16 %v242
    %v420 = vunpack.c.l.b16 %v243
    %v421 = vunpack.c.l.b16 %v244
    %v422 = vunpack.c.h.b16 %v244
    %v423 = vunpack.c.l.b16 %v245
    %v424 = vunpack.c.h.b16 %v245
    %v425 = vunpack.c.l.b16 %v246
    %v426 = vunpack.c.l.b16 %v247
    %v427 = vunpack.c.h.b16 %v247
    %v428 = vunpack.c.l.b16 %v248
    %v429 = vunpack.c.h.b16 %v248
    %v430 = vunpack.c.l.b16 %v249
    %v431 = vunpack.c.l.b16 %v250
    %v432 = vunpack.c.h.b16 %v250
    %v433 = vunpack.c.l.b16 %v251
    %v434 = vunpack.c.h.b16 %v251
    %v435 = vunpack.c.l.b16 %v252
    %v436 = vunpack.c.l.b16 %v253
    %v437 = vunpack.c.h.b16 %v253
    %v438 = vunpack.c.l.b16 %v254
    %v439 = vunpack.c.h.b16 %v254
    %v440 = vunpack.c.l.b16 %v255
    %v441 = vunpack.c.l.b16 %v256
    %v442 = vunpack.c.h.b16 %v256
    %v443 = vunpack.c.l.b16 %v257
    %v444 = vunpack.c.h.b16 %v257
    %v445 = vunpack.c.l.b16 %v258
    %v446 = vunpack.c.l.b16 %v259
    %v447 = vunpack.c.h.b16 %v259
    %v448 = vunpack.c.l.b16 %v260
    %v449 = vunpack.c.h.b16 %v260
    %v450 = vunpack.c.l.b16 %v261
    %v451 = vunpack.c.l.b16 %v262
    %v452 = vunpack.c.h.b16 %v262
    %v453 = vunpack.c.l.b16 %v263
    %v454 = vunpack.c.h.b16 %v263
    %v455 = vunpack.c.l.b16 %v264
    %v456 = vunpack.c.l.b16 %v265
    %v457 = vunpack.c.h.b16 %v265
    %v458 = vunpack.c.l.b16 %v266
    %v459 = vunpack.c.h.b16 %v266
    %v460 = vunpack.c.l.b16 %v267
    %v461 = vunpack.c.l.b16 %v268
    %v462 = vunpack.c.h.b16 %v268
    %v463 = vunpack.c.l.b16 %v269
    %v464 = vunpack.c.h.b16 %v269
    %v465 = vunpack.c.l.b16 %v270
    %v466 = vunpack.c.l.b16 %v271
    %v467 = vunpack.c.h.b16 %v271
    %v468 = vunpack.c.l.b16 %v272
    %v469 = vunpack.c.h.b16 %v272
    %v470 = vunpack.c.l.b16 %v273
    %v471 = vunpack.c.l.b16 %v274
    %v472 = vunpack.c.h.b16 %v274
    %v473 = vunpack.c.l.b16 %v275
    %v474 = vunpack.c.h.b16 %v275
    %v475 = vunpack.c.l.b16 %v276
    %v476 = vunpack.c.l.b16 %v277
    %v477 = vunpack.c.h.b16 %v277
    %v478 = vunpack.c.l.b16 %v278
    %v479 = vunpack.c.h.b16 %v278
    %v480 = vunpack.c.l.b16 %v279
    %v481 = vunpack.c.l.b16 %v280
    %v482 = vunpack.c.h.b16 %v280
    %v483 = vunpack.c.l.b16 %v281
    %v484 = vunpack.c.h.b16 %v281
    %v485 = vunpack.c.l.b16 %v282
    %v486 = vunpack.c.l.b16 %v283
    %v487 = vunpack.c.h.b16 %v283
    %v488 = vunpack.c.l.b16 %v284
    %v489 = vunpack.c.h.b16 %v284
    %v490 = vunpack.c.l.b16 %v285
    %v491 = vunpack.c.l.b16 %v286
    %v492 = vunpack.c.h.b16 %v286
    %v493 = vunpack.c.l.b16 %v287
    %v494 = vunpack.c.h.b16 %v287
    %v495 = vunpack.c.l.b16 %v288
    %v496 = vunpack.c.l.b16 %v289
    %v497 = vunpack.c.h.b16 %v289
    %v498 = vunpack.c.l.b16 %v290
    %v499 = vunpack.c.h.b16 %v290
    %v500 = vunpack.c.l.b16 %v291
    %v501 = vunpack.c.l.b16 %v292
    %v502 = vunpack.c.h.b16 %v292
    %v503 = vunpack.c.l.b16 %v293
    %v504 = vunpack.c.h.b16 %v293
    %v505 = vunpack.c.l.b16 %v294
    %v506 = vunpack.c.l.b16 %v295
    %v507 = vunpack.c.h.b16 %v295
    %v508 = vunpack.c.l.b16 %v296
    %v509 = vunpack.c.h.b16 %v296
    %v510 = vunpack.c.l.b16 %v297
    %v511 = vunpack.c.l.b16 %v298
    %v512 = vunpack.c.h.b16 %v298
    %v513 = vunpack.c.l.b16 %v299
    %v514 = vunpack.c.h.b16 %v299
    %v515 = vunpack.c.l.b16 %v300
    %v516 = vunpack.c.l.b16 %v301
    %v517 = vunpack.c.h.b16 %v301
    %v518 = vunpack.c.l.b16 %v302
    %v519 = vunpack.c.h.b16 %v302
    %v520 = vunpack.c.l.b16 %v303
    %v521 = vunpack.c.l.b16 %v304
    %v522 = vunpack.c.h.b16 %v304
    %v523 = vunpack.c.l.b16 %v305
    %v524 = vunpack.c.h.b16 %v305
    %v525 = vunpack.c.l.b16 %v306
    %v526 = vpack.c.b16 %v411, %v406
    %v527 = vpack.c.b16 %v412, %v407
    %v528 = vpack.c.b16 %v413, %v408
    %v529 = vpack.c.b16 %v414, %v409
    %v530 = vpack.c.b16 %v415, %v410
    %v531 = vpack.c.b16 %v421, %v416
    %v532 = vpack.c.b16 %v422, %v417
    %v533 = vpack.c.b16 %v423, %v418
    %v534 = vpack.c.b16 %v424, %v419
    %v535 = vpack.c.b16 %v425, %v420
    %v536 = vpack.c.b16 %v431, %v426
    %v537 = vpack.c.b16 %v432, %v427
    %v538 = vpack.c.b16 %v433, %v428
    %v539 = vpack.c.b16 %v434, %v429
    %v540 = vpack.c.b16 %v435, %v430
    %v541 = vpack.c.b16 %v441, %v436
    %v542 = vpack.c.b16 %v442, %v437
    %v543 = vpack.c.b16 %v443, %v438
    %v544 = vpack.c.b16 %v444, %v439
    %v545 = vpack.c.b16 %v445, %v440
    %v546 = vpack.c.b16 %v451, %v446
    %v547 = vpack.c.b16 %v452, %v447
    %v548 = vpack.c.b16 %v453, %v448
    %v549 = vpack.c.b16 %v454, %v449
    %v550 = vpack.c.b16 %v455, %v450
    %v551 = vpack.c.b16 %v461, %v456
    %v552 = vpack.c.b16 %v462, %v457
    %v553 = vpack.c.b16 %v463, %v458
    %v554 = vpack.c.b16 %v464, %v459
    %v555 = vpack.c.b16 %v465, %v460
    %v556 = vpack.c.b16 %v471, %v466
    %v557 = vpack.c.b16 %v472, %v467
    %v558 = vpack.c.b16 %v473, %v468
    %v559 = vpack.c.b16 %v474, %v469
    %v560 = vpack.c.b16 %v475, %v470
    %v561 = vpack.c.b16 %v481, %v476
    %v562 = vpack.c.b16 %v482, %v477
    %v563 = vpack.c.b16 %v483, %v478
    %v564 = vpack.c.b16 %v484, %v479
    %v565 = vpack.c.b16 %v485, %v480
    %v566 = vpack.c.b16 %v491, %v486
    %v567 = vpack.c.b16 %v492, %v487
    %v568 = vpack.c.b16 %v493, %v488
    %v569 = vpack.c.b16 %v494, %v489
    %v570 = vpack.c.b16 %v495, %v490
    %v571 = vpack.c.b16 %v501, %v496
    %v572 = vpack.c.b16 %v502, %v497
    %v573 = vpack.c.b16 %v503, %v498
    %v574 = vpack.c.b16 %v504, %v499
    %v575 = vpack.c.b16 %v505, %v500
    %v576 = vpack.c.b16 %v511, %v506
    %v577 = vpack.c.b16 %v512, %v507
    %v578 = vpack.c.b16 %v513, %v508
    %v579 = vpack.c.b16 %v514, %v509
    %v580 = vpack.c.b16 %v515, %v510
    %v581 = vpack.c.b16 %v521, %v516
    %v582 = vpack.c.b16 %v522, %v517
    %v583 = vpack.c.b16 %v523, %v518
    %v584 = vpack.c.b16 %v524, %v519
    %v585 = vpack.c.b16 %v525, %v520
    %vm646 = vcmask 523264
    %v648 = vsel %vm646, %v234, 0
    %650 = vmatprep.subr.bf16.mxu0 %v562
    %651 = vmatpush1.bf16.msra.mxu0 %v561
    %652 = vmatprep.subr.bf16.mxu0 %v557
    %653 = vmatpush1.bf16.msra.mxu0 %v556
    %654 = vmatprep.subr.bf16.mxu0 %v552
    %655 = vmatpush1.bf16.msra.mxu0 %v551
    %656 = vmatprep.subr.bf16.mxu0 %v547
    %657 = vmatpush1.bf16.msra.mxu0 %v546
    %658 = vmatprep.subr.bf16.mxu0 %v542
    %659 = vmatpush1.bf16.msra.mxu0 %v541
    %660 = vmatprep.subr.bf16.mxu0 %v537
    %661 = vmatpush1.bf16.msra.mxu0 %v536
    %662 = vmatprep.subr.bf16.mxu0 %v532
    %663 = vmatpush1.bf16.msra.mxu0 %v531
    %664 = vmatprep.subr.bf16.mxu0 %v527
    %665 = vmatpush1.bf16.msra.mxu0 %v526
    %666 = vmatprep.subr.bf16.mxu0 0
    %667 = vmatpush2.bf16.msra.mxu0 0
    %668 = vmatprep.subr.bf16.mxu0 0
    %669 = vmatpush2.bf16.msra.mxu0 0
    %670 = vmatprep.subr.bf16.mxu0 0
    %671 = vmatpush2.bf16.msra.mxu0 0
    %672 = vmatprep.subr.bf16.mxu0 0
    %673 = vmatpush2.bf16.msra.mxu0 0
    %674 = vmatprep.subr.bf16.mxu0 %v582
    %675 = vmatpush2.bf16.msra.mxu0 %v581
    %676 = vmatprep.subr.bf16.mxu0 %v577
    %677 = vmatpush2.bf16.msra.mxu0 %v576
    %678 = vmatprep.subr.bf16.mxu0 %v572
    %679 = vmatpush2.bf16.msra.mxu0 %v571
    %680 = vmatprep.subr.bf16.mxu0 %v567
    %681 = vmatpush2.bf16.msra.mxu0 %v566
    %682 = vmatprep.mubr.bf16.mxu0 %v648
    %683 = vmatmul.mubr.bf16.gmra.mxu0 %v233
    %v684 = vpop.f32.mrf.mxu0
    %v685 = vadd.f32 %v312, %v684
    %v686 = vpop.f32.mrf.mxu0
    %v687 = vadd.f32 %v316, %v686
    %v688 = vpop.f32.mrf.mxu0
    %v689 = vpop.f32.mrf.mxu0
    %690 = vdwg.mxu0
    %691 = vmatprep.subr.bf16.mxu0 %v564
    %692 = vmatpush1.bf16.msra.mxu0 %v563
    %693 = vmatprep.subr.bf16.mxu0 %v559
    %694 = vmatpush1.bf16.msra.mxu0 %v558
    %695 = vmatprep.subr.bf16.mxu0 %v554
    %696 = vmatpush1.bf16.msra.mxu0 %v553
    %697 = vmatprep.subr.bf16.mxu0 %v549
    %698 = vmatpush1.bf16.msra.mxu0 %v548
    %699 = vmatprep.subr.bf16.mxu0 %v544
    %700 = vmatpush1.bf16.msra.mxu0 %v543
    %701 = vmatprep.subr.bf16.mxu0 %v539
    %702 = vmatpush1.bf16.msra.mxu0 %v538
    %703 = vmatprep.subr.bf16.mxu0 %v534
    %704 = vmatpush1.bf16.msra.mxu0 %v533
    %705 = vmatprep.subr.bf16.mxu0 %v529
    %706 = vmatpush1.bf16.msra.mxu0 %v528
    %707 = vmatprep.subr.bf16.mxu0 0
    %708 = vmatpush2.bf16.msra.mxu0 0
    %709 = vmatprep.subr.bf16.mxu0 0
    %710 = vmatpush2.bf16.msra.mxu0 0
    %711 = vmatprep.subr.bf16.mxu0 0
    %712 = vmatpush2.bf16.msra.mxu0 0
    %713 = vmatprep.subr.bf16.mxu0 0
    %714 = vmatpush2.bf16.msra.mxu0 0
    %715 = vmatprep.subr.bf16.mxu0 %v584
    %716 = vmatpush2.bf16.msra.mxu0 %v583
    %717 = vmatprep.subr.bf16.mxu0 %v579
    %718 = vmatpush2.bf16.msra.mxu0 %v578
    %719 = vmatprep.subr.bf16.mxu0 %v574
    %720 = vmatpush2.bf16.msra.mxu0 %v573
    %721 = vmatprep.subr.bf16.mxu0 %v569
    %722 = vmatpush2.bf16.msra.mxu0 %v568
    %723 = vmatprep.mubr.bf16.mxu0 %v648
    %724 = vmatmul.mubr.bf16.gmra.mxu0 %v233
    %v725 = vpop.f32.mrf.mxu0
    %v726 = vadd.f32 %v320, %v725
    %v727 = vpop.f32.mrf.mxu0
    %v728 = vadd.f32 %v324, %v727
    %v729 = vpop.f32.mrf.mxu0
    %v730 = vpop.f32.mrf.mxu0
    %731 = vdwg.mxu0
    %732 = vmatprep.subr.bf16.mxu0 0
    %733 = vmatpush1.bf16.msra.mxu0 %v565
    %734 = vmatprep.subr.bf16.mxu0 0
    %735 = vmatpush1.bf16.msra.mxu0 %v560
    %736 = vmatprep.subr.bf16.mxu0 0
    %737 = vmatpush1.bf16.msra.mxu0 %v555
    %738 = vmatprep.subr.bf16.mxu0 0
    %739 = vmatpush1.bf16.msra.mxu0 %v550
    %740 = vmatprep.subr.bf16.mxu0 0
    %741 = vmatpush1.bf16.msra.mxu0 %v545
    %742 = vmatprep.subr.bf16.mxu0 0
    %743 = vmatpush1.bf16.msra.mxu0 %v540
    %744 = vmatprep.subr.bf16.mxu0 0
    %745 = vmatpush1.bf16.msra.mxu0 %v535
    %746 = vmatprep.subr.bf16.mxu0 0
    %747 = vmatpush1.bf16.msra.mxu0 %v530
    %748 = vmatprep.subr.bf16.mxu0 0
    %749 = vmatpush2.bf16.msra.mxu0 0
    %750 = vmatprep.subr.bf16.mxu0 0
    %751 = vmatpush2.bf16.msra.mxu0 0
    %752 = vmatprep.subr.bf16.mxu0 0
    %753 = vmatpush2.bf16.msra.mxu0 0
    %754 = vmatprep.subr.bf16.mxu0 0
    %755 = vmatpush2.bf16.msra.mxu0 0
    %756 = vmatprep.subr.bf16.mxu0 0
    %757 = vmatpush2.bf16.msra.mxu0 %v585
    %758 = vmatprep.subr.bf16.mxu0 0
    %759 = vmatpush2.bf16.msra.mxu0 %v580
    %760 = vmatprep.subr.bf16.mxu0 0
    %761 = vmatpush2.bf16.msra.mxu0 %v575
    %762 = vmatprep.subr.bf16.mxu0 0
    %763 = vmatpush2.bf16.msra.mxu0 %v570
    %764 = vmatprep.mubr.bf16.mxu0 %v648
    %765 = vmatmul.mubr.bf16.gmra.mxu0 %v233
    %v766 = vpop.f32.mrf.mxu0
    %v767 = vadd.f32 %v328, %v766
    %v768 = vpop.f32.mrf.mxu0
    %v769 = vpop.f32.mrf.mxu0
    %v770 = vpop.f32.mrf.mxu0
    %771 = vdwg.mxu0
    %772 = vst [vmem:[%s7] sm:$0xff] %v685
    %773 = vst [vmem:[%s7 + $0x8] sm:$0xff] %v687
    %774 = vst [vmem:[%s7 + $0x10] sm:$0xff] %v726
    %775 = vst [vmem:[%s7 + $0x18] sm:$0xff] %v728
    %776 = vst [vmem:[%s7 + $0x20] sm:$0xff] %v767
    // Predicated region
    $region46: #{regressor_ingrs_forward.1} parent=1 // pred_check
      _
    $region47: #{regressor_ingrs_forward.1} parent=1 // pred_check_branch
      %778 = sbr.rel (0) target = $region49
    $region48: #{regressor_ingrs_forward.1} parent=1 // pred_region
      _
    $region49: #{regressor_ingrs_forward.1} parent=1 // pred_fallthru
      _
    // Predicated region
    $region50: #{regressor_ingrs_forward.1} parent=1 // pred_check
      _
    $region51: #{regressor_ingrs_forward.1} parent=1 // pred_check_branch
      %780 = sbr.rel (0) target = $region53
    $region52: #{regressor_ingrs_forward.1} parent=1 // pred_region
      _
    $region53: #{regressor_ingrs_forward.1} parent=1 // pred_fallthru
      _
    %781 = vsyncpa [#allocation3], 1
    %782 = vsyncpa [#allocation5], 1
    %783 = vsyncpa [#allocation8], 1

</llo_original>
